<compile_context>
chip_gen: v7x
topology: tpu7x:2x2x1
jax: 0.10.0
libtpu: 0.0.40
codegen_flags: <defaults>
</compile_context>

<pallas_src>
import math

import jax
import jax.numpy as jnp
import numpy as np
from jax.experimental import pallas as pl
from jax.experimental.pallas import tpu as pltpu


def _cov_aggregator_kernel(lt_ref, kv_ref, kvt_ref, mask_ref, w_ref, b_ref, out_ref):
    """Single invocation, fully transposed layout.

    lt_ref   : (dim, C*dim)    L transposed: lt[d, c*dim+i] = L[c, i, d]
    kv_ref   : (C*S, dim)      kv rows: L_mean[c] - cat(same, diff)[c, s]
    kvt_ref  : (dim, C*S)      kv transposed
    mask_ref : (C*S, C*dim)    additive block-diagonal class mask (0 / -1e30)
    w_ref    : (4*dim, dim)    [I - We ; Wk^T Wq_s (I - We) ; Wfc Wv ; Wout*gamma]
    b_ref    : (4*dim, 1)      [-be ; -Wk^T Wq_s be ; bfc ; Wout beta + bout]
    out_ref  : (dim, C*dim)    L_grad transposed (lane-dense store)
    """
    dim, _ = lt_ref.shape
    f32 = jnp.float32

    # Fused "head" matmul: residual (q_inT) and the pre-mixed query (t) in one shot.
    w_head = w_ref[0:2 * dim, :]                                  # (2*dim, dim)
    head = jnp.dot(w_head, lt_ref[...], preferred_element_type=f32) + b_ref[0:2 * dim, :]
    q_inT = head[0:dim, :]                                        # (dim, CM) residual
    t = head[dim:2 * dim, :]                                      # (dim, CM)

    # Batched per-class attention, transposed: scoresT = kv @ t, mask, sublane softmax.
    scoresT = jnp.dot(kv_ref[...], t, preferred_element_type=f32) + mask_ref[...]
    m = jnp.max(scoresT, axis=0, keepdims=True)                   # (1, CM)
    e = jnp.exp(scoresT - m)                                      # masked rows -> 0
    attnT = e / jnp.sum(e, axis=0, keepdims=True)                 # (CS, CM)

    # attn @ v with the v-projection and fc folded into W_fv at pack time.
    u = jnp.dot(kvt_ref[...], attnT, preferred_element_type=f32)  # (dim, CM)
    w_fv = w_ref[2 * dim:3 * dim, :]
    xT = (jnp.dot(w_fv, u, preferred_element_type=f32)
          + b_ref[2 * dim:3 * dim, :] + q_inT)                    # fc + residual

    # LayerNorm(eps=1e-5) over the feature axis (sublanes); gamma/beta live in Wout.
    mu = jnp.mean(xT, axis=0, keepdims=True)
    xc = xT - mu
    var = jnp.mean(xc * xc, axis=0, keepdims=True)
    nT = xc * jax.lax.rsqrt(var + 1e-5)                           # (dim, CM)

    # Output Linear (gamma/beta/bout already folded), emitted transposed & lane-dense.
    w_out = w_ref[3 * dim:4 * dim, :]
    outT = jnp.dot(w_out, nT, preferred_element_type=f32) + b_ref[3 * dim:4 * dim, :]
    out_ref[...] = outT.astype(out_ref.dtype)                     # (dim, C*dim)


def pack_cov_aggregator_params(params):
    """One-time packing / folding of the module weights (not per-call work)."""
    dim = params["We"].shape[0]
    f = lambda a: jnp.asarray(a, jnp.float32)
    We, be = f(params["We"]), f(params["be"])
    Wq_s = f(params["Wq"]) / math.sqrt(dim)          # fold 1/sqrt(d_k) temperature
    Wk, Wv = f(params["Wk"]), f(params["Wv"])
    Wfc, bfc = f(params["Wfc"]), f(params["bfc"])
    gamma, beta = f(params["gamma"]), f(params["beta"])
    Wout, bout = f(params["Wout"]), f(params["bout"])

    I = jnp.eye(dim, dtype=jnp.float32)
    W_res = I - We                                    # q_inT = W_res @ LT - be
    W_qk = Wk.T @ Wq_s                                # scoresT = kv @ (W_qk @ q_inT)
    W_t = W_qk @ W_res                                # ... folded through the residual
    b_t = -(W_qk @ be)
    W_fv = Wfc @ Wv                                   # fc(attn @ v) fold
    Wout_g = Wout * gamma[None, :]                    # LN gamma fold
    b_out = Wout @ beta + bout                        # LN beta + output bias fold

    w_pack = jnp.concatenate([W_res, W_t, W_fv, Wout_g], axis=0)       # (4*dim, dim)
    b_pack = jnp.concatenate([-be, b_t, bfc, b_out]).reshape(4 * dim, 1)
    return w_pack, b_pack


@jax.jit
def cov_aggregator_forward(L, same_diff, diff_diff, w_pack, b_pack):
    """L: (C, dim, dim); same_diff: (C, shot, dim); diff_diff: (C, shot*(C-1), dim)."""
    C, dim, _ = L.shape
    shot = same_diff.shape[1]
    S = shot * C
    CM, CS = C * dim, C * S

    # Host-side prep (a couple of tiny XLA ops): concat, kv, and the transposed views.
    sd = jnp.concatenate([same_diff, diff_diff], axis=1)            # (C, S, dim)
    kv3 = jnp.mean(L, axis=1, keepdims=True) - sd                   # (C, S, dim)
    kv = kv3.reshape(CS, dim)                                       # (CS, dim)
    kvT = jnp.transpose(kv3, (2, 0, 1)).reshape(dim, CS)            # (dim, CS)
    LT = jnp.transpose(L, (2, 0, 1)).reshape(dim, CM)               # (dim, CM)

    # Additive block-diagonal class mask, built once at trace time (pure constant).
    mask_bias = jnp.asarray(
        np.where((np.arange(CS)[:, None] // S) == (np.arange(CM)[None, :] // dim),
                 0.0, -1e30).astype(np.float32))                    # (CS, CM)

    out_t = pl.pallas_call(
        _cov_aggregator_kernel,
        out_shape=jax.ShapeDtypeStruct((dim, CM), jnp.float32),
        in_specs=[pl.BlockSpec(memory_space=pltpu.MemorySpace.VMEM)] * 6,
        out_specs=pl.BlockSpec(memory_space=pltpu.MemorySpace.VMEM),
    )(LT, kv, kvT, mask_bias, w_pack, b_pack)

    # out_t[j, c*dim + i] == L_grad[c, i, j]  -> back to the module's (C, dim, dim).
    L_grad = jnp.transpose(out_t.reshape(dim, C, dim), (1, 2, 0))

    # PyTorch returns .cuda() zeros; here plain device zeros.
    return (L_grad,
            jnp.zeros((C, shot, dim), jnp.float32),
            jnp.zeros((C, shot * (C - 1), dim), jnp.float32))


def _ref_forward(L, same, diff, p, dim):
    """Pure-JAX reference reproducing the PyTorch forward (eval mode)."""
    C = L.shape[0]
    L_proj = L.reshape(C * dim, dim) @ p["We"].T + p["be"]
    L_proj = L_proj.reshape(C, dim, dim)
    q_in = L - L_proj
    L_mean = jnp.mean(L, axis=1)
    kv = jnp.concatenate([L_mean[:, None, :] - same, L_mean[:, None, :] - diff], axis=1)
    q = q_in @ p["Wq"].T
    k = kv @ p["Wk"].T
    v = kv @ p["Wv"].T
    scores = jnp.einsum("cqd,ckd->cqk", q, k) / jnp.sqrt(jnp.float32(dim))
    attn = jax.nn.softmax(scores, axis=-1)
    out = jnp.einsum("cqk,ckd->cqd", attn, v)
    out = out @ p["Wfc"].T + p["bfc"]
    x = out + q_in
    mu = x.mean(-1, keepdims=True)
    var = ((x - mu) ** 2).mean(-1, keepdims=True)
    ln = (x - mu) / jnp.sqrt(var + 1e-5) * p["gamma"] + p["beta"]
    return ln @ p["Wout"].T + p["bout"]


if __name__ == "__main__":
    dim, shot, class_num = 32, 2, 4
    S_diff = shot * (class_num - 1)

    key = jax.random.PRNGKey(0)
    ks = jax.random.split(key, 16)
    s = 0.1
    params = {
        "We":    jax.random.normal(ks[0],  (dim, dim), jnp.float32) * s,
        "be":    jax.random.normal(ks[1],  (dim,),     jnp.float32) * s,
        "Wq":    jax.random.normal(ks[2],  (dim, dim), jnp.float32) / math.sqrt(2.0 * dim),
        "Wk":    jax.random.normal(ks[3],  (dim, dim), jnp.float32) / math.sqrt(2.0 * dim),
        "Wv":    jax.random.normal(ks[4],  (dim, dim), jnp.float32) / math.sqrt(2.0 * dim),
        "Wfc":   jax.random.normal(ks[5],  (dim, dim), jnp.float32) * s,
        "bfc":   jax.random.normal(ks[6],  (dim,),     jnp.float32) * s,
        "gamma": jnp.ones((dim,), jnp.float32),
        "beta":  jnp.zeros((dim,), jnp.float32),
        "Wout":  jax.random.normal(ks[7],  (dim, dim), jnp.float32) * s,
        "bout":  jax.random.normal(ks[8],  (dim,),     jnp.float32) * s,
    }

    L         = jax.random.normal(ks[9],  (class_num, dim, dim),    jnp.float32)
    same_diff = jax.random.normal(ks[10], (class_num, shot, dim),   jnp.float32)
    diff_diff = jax.random.normal(ks[11], (class_num, S_diff, dim), jnp.float32)

    w_pack, b_pack = pack_cov_aggregator_params(params)

    L_grad, z_same, z_diff = cov_aggregator_forward(L, same_diff, diff_diff, w_pack, b_pack)
    jax.block_until_ready(L_grad)

    ref = _ref_forward(L, same_diff, diff_diff, params, dim)
    np.testing.assert_allclose(np.asarray(L_grad), np.asarray(ref), rtol=2e-5, atol=5e-5)
    assert z_same.shape == (class_num, shot, dim)
    assert z_diff.shape == (class_num, S_diff, dim)

    # TODO(synk): training-mode dropout (p=0.5 in attention and after fc) is not
    # implemented; the kernel matches eval-mode semantics only.
    print("KERNEL_OK")
</pallas_src>

<mosaic_0001>
module attributes {stable_mosaic.version = 11 : i64} {
  func.func @_cov_aggregator_kernel(%arg0: memref<32x128xf32, #tpu.memory_space<vmem>>, %arg1: memref<32x32xf32, #tpu.memory_space<vmem>>, %arg2: memref<32x32xf32, #tpu.memory_space<vmem>>, %arg3: memref<32x128xf32, #tpu.memory_space<vmem>>, %arg4: memref<128x32xf32, #tpu.memory_space<vmem>>, %arg5: memref<128x1xf32, #tpu.memory_space<vmem>>, %arg6: memref<32x128xf32, #tpu.memory_space<vmem>>) attributes {dimension_semantics = [], scalar_prefetch = 0 : i64, scratch_operands = 0 : i64, tpu.core_type = #tpu.core_type<tc>} {
    %c0 = arith.constant 0 : index
    %c0_0 = arith.constant 0 : index
    %0 = vector.load %arg4[%c0, %c0_0] : memref<128x32xf32, #tpu.memory_space<vmem>>, vector<64x32xf32>
    %c0_1 = arith.constant 0 : index
    %c0_2 = arith.constant 0 : index
    %1 = vector.load %arg0[%c0_1, %c0_2] : memref<32x128xf32, #tpu.memory_space<vmem>>, vector<32x128xf32>
    %cst = arith.constant dense<0.000000e+00> : vector<64x128xf32>
    %2 = tpu.matmul %0, %1, %cst {dimension_numbers = #tpu.dot_dimension_numbers<[1], [0], [0], [1], [0, 0, 1, 1], [], []>} : vector<64x32xf32>, vector<32x128xf32>, vector<64x128xf32> -> vector<64x128xf32>
    %c0_3 = arith.constant 0 : index
    %c0_4 = arith.constant 0 : index
    %3 = vector.load %arg5[%c0_3, %c0_4] : memref<128x1xf32, #tpu.memory_space<vmem>>, vector<64x1xf32>
    %4 = vector.broadcast %3 : vector<64x1xf32> to vector<64x128xf32>
    %5 = arith.addf %2, %4 : vector<64x128xf32>
    %6 = vector.extract_strided_slice %5 {offsets = [0, 0], sizes = [32, 128], strides = [1, 1]} : vector<64x128xf32> to vector<32x128xf32>
    %7 = vector.extract_strided_slice %5 {offsets = [32, 0], sizes = [32, 128], strides = [1, 1]} : vector<64x128xf32> to vector<32x128xf32>
    %c0_5 = arith.constant 0 : index
    %c0_6 = arith.constant 0 : index
    %8 = vector.load %arg1[%c0_5, %c0_6] : memref<32x32xf32, #tpu.memory_space<vmem>>, vector<32x32xf32>
    %cst_7 = arith.constant dense<0.000000e+00> : vector<32x128xf32>
    %9 = tpu.matmul %8, %7, %cst_7 {dimension_numbers = #tpu.dot_dimension_numbers<[1], [0], [0], [1], [0, 0, 1, 1], [], []>} : vector<32x32xf32>, vector<32x128xf32>, vector<32x128xf32> -> vector<32x128xf32>
    %c0_8 = arith.constant 0 : index
    %c0_9 = arith.constant 0 : index
    %10 = vector.load %arg3[%c0_8, %c0_9] : memref<32x128xf32, #tpu.memory_space<vmem>>, vector<32x128xf32>
    %11 = arith.addf %9, %10 : vector<32x128xf32>
    %cst_10 = arith.constant dense<0xFF800000> : vector<128xf32>
    %12 = vector.multi_reduction <maximumf>, %11, %cst_10 [0] : vector<32x128xf32> to vector<128xf32>
    %13 = vector.shape_cast %12 : vector<128xf32> to vector<1x128xf32>
    %14 = vector.broadcast %13 : vector<1x128xf32> to vector<32x128xf32>
    %15 = arith.subf %11, %14 : vector<32x128xf32>
    %16 = math.exp %15 : vector<32x128xf32>
    %cst_11 = arith.constant dense<0.000000e+00> : vector<128xf32>
    %17 = vector.multi_reduction <add>, %16, %cst_11 [0] : vector<32x128xf32> to vector<128xf32>
    %18 = vector.shape_cast %17 : vector<128xf32> to vector<1x128xf32>
    %19 = vector.broadcast %18 : vector<1x128xf32> to vector<32x128xf32>
    %20 = arith.divf %16, %19 : vector<32x128xf32>
    %c0_12 = arith.constant 0 : index
    %c0_13 = arith.constant 0 : index
    %21 = vector.load %arg2[%c0_12, %c0_13] : memref<32x32xf32, #tpu.memory_space<vmem>>, vector<32x32xf32>
    %cst_14 = arith.constant dense<0.000000e+00> : vector<32x128xf32>
    %22 = tpu.matmul %21, %20, %cst_14 {dimension_numbers = #tpu.dot_dimension_numbers<[1], [0], [0], [1], [0, 0, 1, 1], [], []>} : vector<32x32xf32>, vector<32x128xf32>, vector<32x128xf32> -> vector<32x128xf32>
    %c64 = arith.constant 64 : index
    %c0_15 = arith.constant 0 : index
    %23 = vector.load %arg4[%c64, %c0_15] : memref<128x32xf32, #tpu.memory_space<vmem>>, vector<32x32xf32>
    %cst_16 = arith.constant dense<0.000000e+00> : vector<32x128xf32>
    %24 = tpu.matmul %23, %22, %cst_16 {dimension_numbers = #tpu.dot_dimension_numbers<[1], [0], [0], [1], [0, 0, 1, 1], [], []>} : vector<32x32xf32>, vector<32x128xf32>, vector<32x128xf32> -> vector<32x128xf32>
    %c64_17 = arith.constant 64 : index
    %c0_18 = arith.constant 0 : index
    %25 = vector.load %arg5[%c64_17, %c0_18] : memref<128x1xf32, #tpu.memory_space<vmem>>, vector<32x1xf32>
    %26 = vector.broadcast %25 : vector<32x1xf32> to vector<32x128xf32>
    %27 = arith.addf %24, %26 : vector<32x128xf32>
    %28 = arith.addf %27, %6 : vector<32x128xf32>
    %cst_19 = arith.constant dense<0.000000e+00> : vector<128xf32>
    %29 = vector.multi_reduction <add>, %28, %cst_19 [0] : vector<32x128xf32> to vector<128xf32>
    %30 = vector.shape_cast %29 : vector<128xf32> to vector<1x128xf32>
    %cst_20 = arith.constant 3.200000e+01 : f32
    %31 = vector.broadcast %cst_20 : f32 to vector<1x128xf32>
    %32 = arith.divf %30, %31 : vector<1x128xf32>
    %33 = vector.broadcast %32 : vector<1x128xf32> to vector<32x128xf32>
    %34 = arith.subf %28, %33 : vector<32x128xf32>
    %35 = arith.mulf %34, %34 : vector<32x128xf32>
    %cst_21 = arith.constant dense<0.000000e+00> : vector<128xf32>
    %36 = vector.multi_reduction <add>, %35, %cst_21 [0] : vector<32x128xf32> to vector<128xf32>
    %37 = vector.shape_cast %36 : vector<128xf32> to vector<1x128xf32>
    %cst_22 = arith.constant 3.200000e+01 : f32
    %38 = vector.broadcast %cst_22 : f32 to vector<1x128xf32>
    %39 = arith.divf %37, %38 : vector<1x128xf32>
    %cst_23 = arith.constant 9.99999974E-6 : f32
    %40 = vector.broadcast %cst_23 : f32 to vector<1x128xf32>
    %41 = arith.addf %39, %40 : vector<1x128xf32>
    %42 = math.rsqrt %41 : vector<1x128xf32>
    %43 = vector.broadcast %42 : vector<1x128xf32> to vector<32x128xf32>
    %44 = arith.mulf %34, %43 : vector<32x128xf32>
    %c96 = arith.constant 96 : index
    %c0_24 = arith.constant 0 : index
    %45 = vector.load %arg4[%c96, %c0_24] : memref<128x32xf32, #tpu.memory_space<vmem>>, vector<32x32xf32>
    %cst_25 = arith.constant dense<0.000000e+00> : vector<32x128xf32>
    %46 = tpu.matmul %45, %44, %cst_25 {dimension_numbers = #tpu.dot_dimension_numbers<[1], [0], [0], [1], [0, 0, 1, 1], [], []>} : vector<32x32xf32>, vector<32x128xf32>, vector<32x128xf32> -> vector<32x128xf32>
    %c96_26 = arith.constant 96 : index
    %c0_27 = arith.constant 0 : index
    %47 = vector.load %arg5[%c96_26, %c0_27] : memref<128x1xf32, #tpu.memory_space<vmem>>, vector<32x1xf32>
    %48 = vector.broadcast %47 : vector<32x1xf32> to vector<32x128xf32>
    %49 = arith.addf %46, %48 : vector<32x128xf32>
    %c0_28 = arith.constant 0 : index
    %c0_29 = arith.constant 0 : index
    %50 = vector.load %arg6[%c0_28, %c0_29] : memref<32x128xf32, #tpu.memory_space<vmem>>, vector<32x128xf32>
    tpu.vector_store %arg6[%c0_28, %c0_29], %49 {strides = array<i32>} : memref<32x128xf32, #tpu.memory_space<vmem>>, vector<32x128xf32>,
    return
  }
}

</mosaic_0001>

<llo_original>
// kernel: cov_aggregator_forward.1
$region0: #{cov_aggregator_forward.1}
  #allocation0 [shape = 'u32[]', space=smem, size = 0x4, offset = 0x4, fixed_abs, tag = 'smem constant byte address 0x4 - core index']
  #allocation1 [shape = 'u32[144,128]{1,0:T(1,128)}', space=vmem, size = 0x12000, scoped, tag = 'internal scratch']
  %s0 = inlined_call_operand.vmem [shape: f32[32,128], index: 0, kind: input, shape index: {}]
  %s1 = inlined_call_operand.vmem [shape: f32[32,32], index: 1, kind: input, shape index: {}]
  %s2 = inlined_call_operand.vmem [shape: f32[32,32], index: 2, kind: input, shape index: {}]
  %s3 = inlined_call_operand.vmem [shape: f32[32,128], index: 3, kind: input, shape index: {}]
  %s4 = inlined_call_operand.vmem [shape: f32[128,32], index: 4, kind: input, shape index: {}]
  %s5 = inlined_call_operand.vmem [shape: f32[128,1], index: 5, kind: input, shape index: {}]
  %s6 = inlined_call_operand.vmem [shape: f32[32,128], index: 6, kind: output, shape index: {}]
  %s7 = sld [smem:[#allocation0]]
  $region34: #{cov_aggregator_forward.1} parent=0
    _
  %s9 = ssub.s32 1, %s7
  %s10 = scalar_select 0, %s9, %s7
  // Predicated region
  $region2: #{cov_aggregator_forward.1} parent=0 // pred_check
    _
  $region3: #{cov_aggregator_forward.1} parent=0 // pred_check_branch
    %12 = sbr.rel (0) target = $region5
  $region4: #{cov_aggregator_forward.1} parent=0 // pred_region
    _
  $region5: #{cov_aggregator_forward.1} parent=0 // pred_fallthru
    _
  // Predicated region
  $region6: #{cov_aggregator_forward.1} parent=0 // pred_check
    _
  $region7: #{cov_aggregator_forward.1} parent=0 // pred_check_branch
    %14 = sbr.rel (0) target = $region9
  $region8: #{cov_aggregator_forward.1} parent=0 // pred_region
    _
  $region9: #{cov_aggregator_forward.1} parent=0 // pred_fallthru
    _
  // Predicated region
  $region10: #{cov_aggregator_forward.1} parent=0 // pred_check
    _
  $region11: #{cov_aggregator_forward.1} parent=0 // pred_check_branch
    %16 = sbr.rel (0) target = $region13
  $region12: #{cov_aggregator_forward.1} parent=0 // pred_region
    _
  $region13: #{cov_aggregator_forward.1} parent=0 // pred_fallthru
    _
  // Predicated region
  $region14: #{cov_aggregator_forward.1} parent=0 // pred_check
    _
  $region15: #{cov_aggregator_forward.1} parent=0 // pred_check_branch
    %18 = sbr.rel (0) target = $region17
  $region16: #{cov_aggregator_forward.1} parent=0 // pred_region
    _
  $region17: #{cov_aggregator_forward.1} parent=0 // pred_fallthru
    _
  // Predicated region
  $region18: #{cov_aggregator_forward.1} parent=0 // pred_check
    _
  $region19: #{cov_aggregator_forward.1} parent=0 // pred_check_branch
    %20 = sbr.rel (0) target = $region21
  $region20: #{cov_aggregator_forward.1} parent=0 // pred_region
    _
  $region21: #{cov_aggregator_forward.1} parent=0 // pred_fallthru
    _
  // Predicated region
  $region22: #{cov_aggregator_forward.1} parent=0 // pred_check
    _
  $region23: #{cov_aggregator_forward.1} parent=0 // pred_check_branch
    %22 = sbr.rel (0) target = $region25
  $region24: #{cov_aggregator_forward.1} parent=0 // pred_region
    _
  $region25: #{cov_aggregator_forward.1} parent=0 // pred_fallthru
    _
  %v23 = vld [vmem:[%s4] sm:$0xff]
  %v24 = vld [vmem:[%s4 + $0x8] sm:$0xff]
  %v25 = vld [vmem:[%s4 + $0x10] sm:$0xff]
  %v26 = vld [vmem:[%s4 + $0x18] sm:$0xff]
  %v27 = vld [vmem:[%s4 + $0x20] sm:$0xff]
  %v28 = vld [vmem:[%s4 + $0x28] sm:$0xff]
  %v29 = vld [vmem:[%s4 + $0x30] sm:$0xff]
  %v30 = vld [vmem:[%s4 + $0x38] sm:$0xff]
  %v31 = vld [vmem:[%s0] sm:$0xff]
  %v32 = vld [vmem:[%s0 + $0x8] sm:$0xff]
  %v33 = vld [vmem:[%s0 + $0x10] sm:$0xff]
  %v34 = vld [vmem:[%s0 + $0x18] sm:$0xff]
  %v35 = vld [vmem:[%s5] sm:$0xff]
  %v36 = vld [vmem:[%s5 + $0x8] sm:$0xff]
  %v37 = vld [vmem:[%s5 + $0x10] sm:$0xff]
  %v38 = vld [vmem:[%s5 + $0x18] sm:$0xff]
  %v39 = vld [vmem:[%s5 + $0x20] sm:$0xff]
  %v40 = vld [vmem:[%s5 + $0x28] sm:$0xff]
  %v41 = vld [vmem:[%s5 + $0x30] sm:$0xff]
  %v42 = vld [vmem:[%s5 + $0x38] sm:$0xff]
  %44 = vset.pattern.permute.xlu0 0
  %45 = vperm.xlu0 %44, %v35
  %v46 = vpop.permute.xlu0 %45
  %49 = vset.pattern.permute.xlu0 0
  %50 = vperm.xlu0 %49, %v36
  %v51 = vpop.permute.xlu0 %50
  %54 = vset.pattern.permute.xlu0 0
  %55 = vperm.xlu0 %54, %v37
  %v56 = vpop.permute.xlu0 %55
  %59 = vset.pattern.permute.xlu0 0
  %60 = vperm.xlu0 %59, %v38
  %v61 = vpop.permute.xlu0 %60
  %64 = vset.pattern.permute.xlu0 0
  %65 = vperm.xlu0 %64, %v39
  %v66 = vpop.permute.xlu0 %65
  %69 = vset.pattern.permute.xlu0 0
  %70 = vperm.xlu0 %69, %v40
  %v71 = vpop.permute.xlu0 %70
  %74 = vset.pattern.permute.xlu0 0
  %75 = vperm.xlu0 %74, %v41
  %v76 = vpop.permute.xlu0 %75
  %79 = vset.pattern.permute.xlu0 0
  %80 = vperm.xlu0 %79, %v42
  %v81 = vpop.permute.xlu0 %80
  %vm83 = vcmask 261120
  %v85 = vsel %vm83, %v23, 0
  %v88 = vsel %vm83, %v24, 0
  %v91 = vsel %vm83, %v25, 0
  %v94 = vsel %vm83, %v26, 0
  %v97 = vsel %vm83, %v27, 0
  %v100 = vsel %vm83, %v28, 0
  %v103 = vsel %vm83, %v29, 0
  %v106 = vsel %vm83, %v30, 0
  %108 = vmatprep.subr.mxu0 0.0
  %109 = vmatpush1.msra.mxu0 %v31
  %110 = vmatprep.subr.mxu0 0.0
  %111 = vmatpush1.msra.mxu0 %v32
  %112 = vmatprep.subr.mxu0 0.0
  %113 = vmatpush1.msra.mxu0 %v33
  %114 = vmatprep.subr.mxu0 0.0
  %115 = vmatpush1.msra.mxu0 %v34
  %116 = vmatprep.subr.mxu0 0.0
  %117 = vmatpush1.msra.mxu0 0.0
  %118 = vmatprep.subr.mxu0 0.0
  %119 = vmatpush1.msra.mxu0 0.0
  %120 = vmatprep.subr.mxu0 0.0
  %121 = vmatpush1.msra.mxu0 0.0
  %122 = vmatprep.subr.mxu0 0.0
  %123 = vmatpush1.msra.mxu0 0.0
  %124 = vmatprep.subr.mxu0 0.0
  %125 = vmatpush1.msra.mxu0 0.0
  %126 = vmatprep.subr.mxu0 0.0
  %127 = vmatpush1.msra.mxu0 0.0
  %128 = vmatprep.subr.mxu0 0.0
  %129 = vmatpush1.msra.mxu0 0.0
  %130 = vmatprep.subr.mxu0 0.0
  %131 = vmatpush1.msra.mxu0 0.0
  %132 = vmatprep.subr.mxu0 0.0
  %133 = vmatpush1.msra.mxu0 0.0
  %134 = vmatprep.subr.mxu0 0.0
  %135 = vmatpush1.msra.mxu0 0.0
  %136 = vmatprep.subr.mxu0 0.0
  %137 = vmatpush1.msra.mxu0 0.0
  %138 = vmatprep.subr.mxu0 0.0
  %139 = vmatpush1.msra.mxu0 0.0
  %140 = vmatprep.subr.mxu0 0.0
  %141 = vmatpush1.msra.mxu0 0.0
  %142 = vmatprep.subr.mxu0 0.0
  %143 = vmatpush1.msra.mxu0 0.0
  %144 = vmatprep.subr.mxu0 0.0
  %145 = vmatpush1.msra.mxu0 0.0
  %146 = vmatprep.subr.mxu0 0.0
  %147 = vmatpush1.msra.mxu0 0.0
  %148 = vmatprep.subr.mxu0 0.0
  %149 = vmatpush1.msra.mxu0 0.0
  %150 = vmatprep.subr.mxu0 0.0
  %151 = vmatpush1.msra.mxu0 0.0
  %152 = vmatprep.subr.mxu0 0.0
  %153 = vmatpush1.msra.mxu0 0.0
  %154 = vmatprep.subr.mxu0 0.0
  %155 = vmatpush1.msra.mxu0 0.0
  %156 = vmatprep.subr.mxu0 0.0
  %157 = vmatpush1.msra.mxu0 0.0
  %158 = vmatprep.subr.mxu0 0.0
  %159 = vmatpush1.msra.mxu0 0.0
  %160 = vmatprep.subr.mxu0 0.0
  %161 = vmatpush1.msra.mxu0 0.0
  %162 = vmatprep.subr.mxu0 0.0
  %163 = vmatpush1.msra.mxu0 0.0
  %164 = vmatprep.subr.mxu0 0.0
  %165 = vmatpush1.msra.mxu0 0.0
  %166 = vmatprep.subr.mxu0 0.0
  %167 = vmatpush1.msra.mxu0 0.0
  %168 = vmatprep.subr.mxu0 0.0
  %169 = vmatpush1.msra.mxu0 0.0
  %170 = vmatprep.subr.mxu0 0.0
  %171 = vmatpush1.msra.mxu0 0.0
  %172 = vmatprep.mubr.f32.mxu0 0.0
  %173 = vmatmul.mubr.f32.gmra.mrb[0].mxu0 %v85
  %v174 = vpop.f32.mrb[0].mxu0
  %v175 = vadd.f32 %v46, %v174
  %v176 = vpop.f32.mrb[0].mxu0
  %177 = vmatprep.mubr.f32.mxu0 0.0
  %178 = vmatmul.mubr.f32.gmra.mrb[0].mxu0 %v88
  %v179 = vpop.f32.mrb[0].mxu0
  %v180 = vadd.f32 %v51, %v179
  %v181 = vpop.f32.mrb[0].mxu0
  %182 = vmatprep.mubr.f32.mxu0 0.0
  %183 = vmatmul.mubr.f32.gmra.mrb[0].mxu0 %v91
  %v184 = vpop.f32.mrb[0].mxu0
  %v185 = vadd.f32 %v56, %v184
  %v186 = vpop.f32.mrb[0].mxu0
  %187 = vmatprep.mubr.f32.mxu0 0.0
  %188 = vmatmul.mubr.f32.gmra.mrb[0].mxu0 %v94
  %v189 = vpop.f32.mrb[0].mxu0
  %v190 = vadd.f32 %v61, %v189
  %v191 = vpop.f32.mrb[0].mxu0
  %192 = vmatprep.mubr.f32.mxu0 0.0
  %193 = vmatmul.mubr.f32.gmra.mrb[0].mxu0 %v97
  %v194 = vpop.f32.mrb[0].mxu0
  %v195 = vadd.f32 %v66, %v194
  %v196 = vpop.f32.mrb[0].mxu0
  %197 = vmatprep.mubr.f32.mxu0 0.0
  %198 = vmatmul.mubr.f32.gmra.mrb[0].mxu0 %v100
  %v199 = vpop.f32.mrb[0].mxu0
  %v200 = vadd.f32 %v71, %v199
  %v201 = vpop.f32.mrb[0].mxu0
  %202 = vmatprep.mubr.f32.mxu0 0.0
  %203 = vmatmul.mubr.f32.gmra.mrb[0].mxu0 %v103
  %v204 = vpop.f32.mrb[0].mxu0
  %v205 = vadd.f32 %v76, %v204
  %v206 = vpop.f32.mrb[0].mxu0
  %207 = vmatprep.mubr.f32.mxu0 0.0
  %208 = vmatmul.mubr.f32.gmra.mrb[0].mxu0 %v106
  %v209 = vpop.f32.mrb[0].mxu0
  %v210 = vadd.f32 %v81, %v209
  %v211 = vpop.f32.mrb[0].mxu0
  %212 = vdwg.mxu0
  %v213 = vld [vmem:[%s1] sm:$0xff]
  %v214 = vld [vmem:[%s1 + $0x8] sm:$0xff]
  %v215 = vld [vmem:[%s1 + $0x10] sm:$0xff]
  %v216 = vld [vmem:[%s1 + $0x18] sm:$0xff]
  %v217 = vld [vmem:[%s3] sm:$0xff]
  %v218 = vld [vmem:[%s3 + $0x8] sm:$0xff]
  %v219 = vld [vmem:[%s3 + $0x10] sm:$0xff]
  %v220 = vld [vmem:[%s3 + $0x18] sm:$0xff]
  %v222 = vsel %vm83, %v213, 0
  %v225 = vsel %vm83, %v214, 0
  %v228 = vsel %vm83, %v215, 0
  %v231 = vsel %vm83, %v216, 0
  %233 = vmatprep.subr.mxu0 0.0
  %234 = vmatpush1.msra.mxu0 %v195
  %235 = vmatprep.subr.mxu0 0.0
  %236 = vmatpush1.msra.mxu0 %v200
  %237 = vmatprep.subr.mxu0 0.0
  %238 = vmatpush1.msra.mxu0 %v205
  %239 = vmatprep.subr.mxu0 0.0
  %240 = vmatpush1.msra.mxu0 %v210
  %241 = vmatprep.subr.mxu0 0.0
  %242 = vmatpush1.msra.mxu0 0.0
  %243 = vmatprep.subr.mxu0 0.0
  %244 = vmatpush1.msra.mxu0 0.0
  %245 = vmatprep.subr.mxu0 0.0
  %246 = vmatpush1.msra.mxu0 0.0
  %247 = vmatprep.subr.mxu0 0.0
  %248 = vmatpush1.msra.mxu0 0.0
  %249 = vmatprep.subr.mxu0 0.0
  %250 = vmatpush1.msra.mxu0 0.0
  %251 = vmatprep.subr.mxu0 0.0
  %252 = vmatpush1.msra.mxu0 0.0
  %253 = vmatprep.subr.mxu0 0.0
  %254 = vmatpush1.msra.mxu0 0.0
  %255 = vmatprep.subr.mxu0 0.0
  %256 = vmatpush1.msra.mxu0 0.0
  %257 = vmatprep.subr.mxu0 0.0
  %258 = vmatpush1.msra.mxu0 0.0
  %259 = vmatprep.subr.mxu0 0.0
  %260 = vmatpush1.msra.mxu0 0.0
  %261 = vmatprep.subr.mxu0 0.0
  %262 = vmatpush1.msra.mxu0 0.0
  %263 = vmatprep.subr.mxu0 0.0
  %264 = vmatpush1.msra.mxu0 0.0
  %265 = vmatprep.subr.mxu0 0.0
  %266 = vmatpush1.msra.mxu0 0.0
  %267 = vmatprep.subr.mxu0 0.0
  %268 = vmatpush1.msra.mxu0 0.0
  %269 = vmatprep.subr.mxu0 0.0
  %270 = vmatpush1.msra.mxu0 0.0
  %271 = vmatprep.subr.mxu0 0.0
  %272 = vmatpush1.msra.mxu0 0.0
  %273 = vmatprep.subr.mxu0 0.0
  %274 = vmatpush1.msra.mxu0 0.0
  %275 = vmatprep.subr.mxu0 0.0
  %276 = vmatpush1.msra.mxu0 0.0
  %277 = vmatprep.subr.mxu0 0.0
  %278 = vmatpush1.msra.mxu0 0.0
  %279 = vmatprep.subr.mxu0 0.0
  %280 = vmatpush1.msra.mxu0 0.0
  %281 = vmatprep.subr.mxu0 0.0
  %282 = vmatpush1.msra.mxu0 0.0
  %283 = vmatprep.subr.mxu0 0.0
  %284 = vmatpush1.msra.mxu0 0.0
  %285 = vmatprep.subr.mxu0 0.0
  %286 = vmatpush1.msra.mxu0 0.0
  %287 = vmatprep.subr.mxu0 0.0
  %288 = vmatpush1.msra.mxu0 0.0
  %289 = vmatprep.subr.mxu0 0.0
  %290 = vmatpush1.msra.mxu0 0.0
  %291 = vmatprep.subr.mxu0 0.0
  %292 = vmatpush1.msra.mxu0 0.0
  %293 = vmatprep.subr.mxu0 0.0
  %294 = vmatpush1.msra.mxu0 0.0
  %295 = vmatprep.subr.mxu0 0.0
  %296 = vmatpush1.msra.mxu0 0.0
  %297 = vmatprep.mubr.f32.mxu0 0.0
  %298 = vmatmul.mubr.f32.gmra.mrb[0].mxu0 %v222
  %v299 = vpop.f32.mrb[0].mxu0
  %v300 = vadd.f32 %v217, %v299
  %v301 = vpop.f32.mrb[0].mxu0
  %302 = vmatprep.mubr.f32.mxu0 0.0
  %303 = vmatmul.mubr.f32.gmra.mrb[0].mxu0 %v225
  %v304 = vpop.f32.mrb[0].mxu0
  %v305 = vadd.f32 %v218, %v304
  %v306 = vpop.f32.mrb[0].mxu0
  %307 = vmatprep.mubr.f32.mxu0 0.0
  %308 = vmatmul.mubr.f32.gmra.mrb[0].mxu0 %v228
  %v309 = vpop.f32.mrb[0].mxu0
  %v310 = vadd.f32 %v219, %v309
  %v311 = vpop.f32.mrb[0].mxu0
  %312 = vmatprep.mubr.f32.mxu0 0.0
  %313 = vmatmul.mubr.f32.gmra.mrb[0].mxu0 %v231
  %v314 = vpop.f32.mrb[0].mxu0
  %v315 = vadd.f32 %v220, %v314
  %v316 = vpop.f32.mrb[0].mxu0
  %317 = vdwg.mxu0
  %v318 = vmax.f32 %v300, %v305
  %v319 = vmax.f32 %v310, %v315
  %v320 = vmax.f32 %v318, %v319
  %v321 = vrot.slane %v320, 4
  %v322 = vmax.f32 %v320, %v321
  %v323 = vrot.slane %v322, 2
  %v324 = vmax.f32 %v322, %v323
  %v325 = vrot.slane %v324, 1
  %v326 = vmax.f32 %v324, %v325
  %v327 = vsub.f32 %v300, %v326
  %v328 = vsub.f32 %v305, %v326
  %v329 = vsub.f32 %v310, %v326
  %v330 = vsub.f32 %v315, %v326
  %v331 = vmul.f32 %v327, 1.442695
  %v332 = vpow.pop %v331
  %v333 = vmul.f32 %v328, 1.442695
  %v334 = vpow.pop %v333
  %v335 = vmul.f32 %v329, 1.442695
  %v336 = vpow.pop %v335
  %v337 = vmul.f32 %v330, 1.442695
  %v338 = vpow.pop %v337
  %v339 = vadd.f32 %v332, %v334
  %v340 = vadd.f32 %v339, %v336
  %v341 = vadd.f32 %v340, %v338
  %v342 = vrot.slane %v341, 4
  %v343 = vadd.f32 %v341, %v342
  %v344 = vrot.slane %v343, 2
  %v345 = vadd.f32 %v343, %v344
  %v346 = vrot.slane %v345, 1
  %v347 = vadd.f32 %v345, %v346
  %v348 = vrcp.pop %v347
  %v349 = vmul.f32 %v332, %v348
  %v350 = vmul.f32 %v334, %v348
  %v351 = vmul.f32 %v336, %v348
  %v352 = vmul.f32 %v338, %v348
  %v353 = vld [vmem:[%s2] sm:$0xff]
  %v354 = vld [vmem:[%s2 + $0x8] sm:$0xff]
  %v355 = vld [vmem:[%s2 + $0x10] sm:$0xff]
  %v356 = vld [vmem:[%s2 + $0x18] sm:$0xff]
  %v358 = vsel %vm83, %v353, 0
  %v361 = vsel %vm83, %v354, 0
  %v364 = vsel %vm83, %v355, 0
  %v367 = vsel %vm83, %v356, 0
  %369 = vmatprep.subr.mxu0 0.0
  %370 = vmatpush1.msra.mxu0 %v349
  %371 = vmatprep.subr.mxu0 0.0
  %372 = vmatpush1.msra.mxu0 %v350
  %373 = vmatprep.subr.mxu0 0.0
  %374 = vmatpush1.msra.mxu0 %v351
  %375 = vmatprep.subr.mxu0 0.0
  %376 = vmatpush1.msra.mxu0 %v352
  %377 = vmatprep.subr.mxu0 0.0
  %378 = vmatpush1.msra.mxu0 0.0
  %379 = vmatprep.subr.mxu0 0.0
  %380 = vmatpush1.msra.mxu0 0.0
  %381 = vmatprep.subr.mxu0 0.0
  %382 = vmatpush1.msra.mxu0 0.0
  %383 = vmatprep.subr.mxu0 0.0
  %384 = vmatpush1.msra.mxu0 0.0
  %385 = vmatprep.subr.mxu0 0.0
  %386 = vmatpush1.msra.mxu0 0.0
  %387 = vmatprep.subr.mxu0 0.0
  %388 = vmatpush1.msra.mxu0 0.0
  %389 = vmatprep.subr.mxu0 0.0
  %390 = vmatpush1.msra.mxu0 0.0
  %391 = vmatprep.subr.mxu0 0.0
  %392 = vmatpush1.msra.mxu0 0.0
  %393 = vmatprep.subr.mxu0 0.0
  %394 = vmatpush1.msra.mxu0 0.0
  %395 = vmatprep.subr.mxu0 0.0
  %396 = vmatpush1.msra.mxu0 0.0
  %397 = vmatprep.subr.mxu0 0.0
  %398 = vmatpush1.msra.mxu0 0.0
  %399 = vmatprep.subr.mxu0 0.0
  %400 = vmatpush1.msra.mxu0 0.0
  %401 = vmatprep.subr.mxu0 0.0
  %402 = vmatpush1.msra.mxu0 0.0
  %403 = vmatprep.subr.mxu0 0.0
  %404 = vmatpush1.msra.mxu0 0.0
  %405 = vmatprep.subr.mxu0 0.0
  %406 = vmatpush1.msra.mxu0 0.0
  %407 = vmatprep.subr.mxu0 0.0
  %408 = vmatpush1.msra.mxu0 0.0
  %409 = vmatprep.subr.mxu0 0.0
  %410 = vmatpush1.msra.mxu0 0.0
  %411 = vmatprep.subr.mxu0 0.0
  %412 = vmatpush1.msra.mxu0 0.0
  %413 = vmatprep.subr.mxu0 0.0
  %414 = vmatpush1.msra.mxu0 0.0
  %415 = vmatprep.subr.mxu0 0.0
  %416 = vmatpush1.msra.mxu0 0.0
  %417 = vmatprep.subr.mxu0 0.0
  %418 = vmatpush1.msra.mxu0 0.0
  %419 = vmatprep.subr.mxu0 0.0
  %420 = vmatpush1.msra.mxu0 0.0
  %421 = vmatprep.subr.mxu0 0.0
  %422 = vmatpush1.msra.mxu0 0.0
  %423 = vmatprep.subr.mxu0 0.0
  %424 = vmatpush1.msra.mxu0 0.0
  %425 = vmatprep.subr.mxu0 0.0
  %426 = vmatpush1.msra.mxu0 0.0
  %427 = vmatprep.subr.mxu0 0.0
  %428 = vmatpush1.msra.mxu0 0.0
  %429 = vmatprep.subr.mxu0 0.0
  %430 = vmatpush1.msra.mxu0 0.0
  %431 = vmatprep.subr.mxu0 0.0
  %432 = vmatpush1.msra.mxu0 0.0
  %433 = vmatprep.mubr.f32.mxu0 0.0
  %434 = vmatmul.mubr.f32.gmra.mrb[0].mxu0 %v358
  %v435 = vpop.f32.mrb[0].mxu0
  %v436 = vadd.f32 0.0, %v435
  %v437 = vpop.f32.mrb[0].mxu0
  %438 = vmatprep.mubr.f32.mxu0 0.0
  %439 = vmatmul.mubr.f32.gmra.mrb[0].mxu0 %v361
  %v440 = vpop.f32.mrb[0].mxu0
  %v441 = vadd.f32 0.0, %v440
  %v442 = vpop.f32.mrb[0].mxu0
  %443 = vmatprep.mubr.f32.mxu0 0.0
  %444 = vmatmul.mubr.f32.gmra.mrb[0].mxu0 %v364
  %v445 = vpop.f32.mrb[0].mxu0
  %v446 = vadd.f32 0.0, %v445
  %v447 = vpop.f32.mrb[0].mxu0
  %448 = vmatprep.mubr.f32.mxu0 0.0
  %449 = vmatmul.mubr.f32.gmra.mrb[0].mxu0 %v367
  %v450 = vpop.f32.mrb[0].mxu0
  %v451 = vadd.f32 0.0, %v450
  %v452 = vpop.f32.mrb[0].mxu0
  %453 = vdwg.mxu0
  %v454 = vld [vmem:[%s4 + $0x40] sm:$0xff]
  %v455 = vld [vmem:[%s4 + $0x48] sm:$0xff]
  %v456 = vld [vmem:[%s4 + $0x50] sm:$0xff]
  %v457 = vld [vmem:[%s4 + $0x58] sm:$0xff]
  %v458 = vld [vmem:[%s5 + $0x40] sm:$0xff]
  %v459 = vld [vmem:[%s5 + $0x48] sm:$0xff]
  %v460 = vld [vmem:[%s5 + $0x50] sm:$0xff]
  %v461 = vld [vmem:[%s5 + $0x58] sm:$0xff]
  %463 = vset.pattern.permute.xlu0 0
  %464 = vperm.xlu0 %463, %v458
  %v465 = vpop.permute.xlu0 %464
  %468 = vset.pattern.permute.xlu0 0
  %469 = vperm.xlu0 %468, %v459
  %v470 = vpop.permute.xlu0 %469
  %473 = vset.pattern.permute.xlu0 0
  %474 = vperm.xlu0 %473, %v460
  %v475 = vpop.permute.xlu0 %474
  %478 = vset.pattern.permute.xlu0 0
  %479 = vperm.xlu0 %478, %v461
  %v480 = vpop.permute.xlu0 %479
  %v483 = vsel %vm83, %v454, 0
  %v486 = vsel %vm83, %v455, 0
  %v489 = vsel %vm83, %v456, 0
  %v492 = vsel %vm83, %v457, 0
  %494 = vmatprep.subr.mxu0 0.0
  %495 = vmatpush1.msra.mxu0 %v436
  %496 = vmatprep.subr.mxu0 0.0
  %497 = vmatpush1.msra.mxu0 %v441
  %498 = vmatprep.subr.mxu0 0.0
  %499 = vmatpush1.msra.mxu0 %v446
  %500 = vmatprep.subr.mxu0 0.0
  %501 = vmatpush1.msra.mxu0 %v451
  %502 = vmatprep.subr.mxu0 0.0
  %503 = vmatpush1.msra.mxu0 0.0
  %504 = vmatprep.subr.mxu0 0.0
  %505 = vmatpush1.msra.mxu0 0.0
  %506 = vmatprep.subr.mxu0 0.0
  %507 = vmatpush1.msra.mxu0 0.0
  %508 = vmatprep.subr.mxu0 0.0
  %509 = vmatpush1.msra.mxu0 0.0
  %510 = vmatprep.subr.mxu0 0.0
  %511 = vmatpush1.msra.mxu0 0.0
  %512 = vmatprep.subr.mxu0 0.0
  %513 = vmatpush1.msra.mxu0 0.0
  %514 = vmatprep.subr.mxu0 0.0
  %515 = vmatpush1.msra.mxu0 0.0
  %516 = vmatprep.subr.mxu0 0.0
  %517 = vmatpush1.msra.mxu0 0.0
  %518 = vmatprep.subr.mxu0 0.0
  %519 = vmatpush1.msra.mxu0 0.0
  %520 = vmatprep.subr.mxu0 0.0
  %521 = vmatpush1.msra.mxu0 0.0
  %522 = vmatprep.subr.mxu0 0.0
  %523 = vmatpush1.msra.mxu0 0.0
  %524 = vmatprep.subr.mxu0 0.0
  %525 = vmatpush1.msra.mxu0 0.0
  %526 = vmatprep.subr.mxu0 0.0
  %527 = vmatpush1.msra.mxu0 0.0
  %528 = vmatprep.subr.mxu0 0.0
  %529 = vmatpush1.msra.mxu0 0.0
  %530 = vmatprep.subr.mxu0 0.0
  %531 = vmatpush1.msra.mxu0 0.0
  %532 = vmatprep.subr.mxu0 0.0
  %533 = vmatpush1.msra.mxu0 0.0
  %534 = vmatprep.subr.mxu0 0.0
  %535 = vmatpush1.msra.mxu0 0.0
  %536 = vmatprep.subr.mxu0 0.0
  %537 = vmatpush1.msra.mxu0 0.0
  %538 = vmatprep.subr.mxu0 0.0
  %539 = vmatpush1.msra.mxu0 0.0
  %540 = vmatprep.subr.mxu0 0.0
  %541 = vmatpush1.msra.mxu0 0.0
  %542 = vmatprep.subr.mxu0 0.0
  %543 = vmatpush1.msra.mxu0 0.0
  %544 = vmatprep.subr.mxu0 0.0
  %545 = vmatpush1.msra.mxu0 0.0
  %546 = vmatprep.subr.mxu0 0.0
  %547 = vmatpush1.msra.mxu0 0.0
  %548 = vmatprep.subr.mxu0 0.0
  %549 = vmatpush1.msra.mxu0 0.0
  %550 = vmatprep.subr.mxu0 0.0
  %551 = vmatpush1.msra.mxu0 0.0
  %552 = vmatprep.subr.mxu0 0.0
  %553 = vmatpush1.msra.mxu0 0.0
  %554 = vmatprep.subr.mxu0 0.0
  %555 = vmatpush1.msra.mxu0 0.0
  %556 = vmatprep.subr.mxu0 0.0
  %557 = vmatpush1.msra.mxu0 0.0
  %558 = vmatprep.mubr.f32.mxu0 0.0
  %559 = vmatmul.mubr.f32.gmra.mrb[0].mxu0 %v483
  %v560 = vpop.f32.mrb[0].mxu0
  %v561 = vadd.f32 %v465, %v560
  %v562 = vpop.f32.mrb[0].mxu0
  %563 = vmatprep.mubr.f32.mxu0 0.0
  %564 = vmatmul.mubr.f32.gmra.mrb[0].mxu0 %v486
  %v565 = vpop.f32.mrb[0].mxu0
  %v566 = vadd.f32 %v470, %v565
  %v567 = vpop.f32.mrb[0].mxu0
  %568 = vmatprep.mubr.f32.mxu0 0.0
  %569 = vmatmul.mubr.f32.gmra.mrb[0].mxu0 %v489
  %v570 = vpop.f32.mrb[0].mxu0
  %v571 = vadd.f32 %v475, %v570
  %v572 = vpop.f32.mrb[0].mxu0
  %573 = vmatprep.mubr.f32.mxu0 0.0
  %574 = vmatmul.mubr.f32.gmra.mrb[0].mxu0 %v492
  %v575 = vpop.f32.mrb[0].mxu0
  %v576 = vadd.f32 %v480, %v575
  %v577 = vpop.f32.mrb[0].mxu0
  %578 = vdwg.mxu0
  %v579 = vadd.f32 %v561, %v175
  %v580 = vadd.f32 %v566, %v180
  %v581 = vadd.f32 %v571, %v185
  %v582 = vadd.f32 %v576, %v190
  %v583 = vadd.f32 %v579, %v580
  %v584 = vadd.f32 %v583, %v581
  %v585 = vadd.f32 %v584, %v582
  %v586 = vrot.slane %v585, 4
  %v587 = vadd.f32 %v585, %v586
  %v588 = vrot.slane %v587, 2
  %v589 = vadd.f32 %v587, %v588
  %v590 = vrot.slane %v589, 1
  %v591 = vadd.f32 %v589, %v590
  %v592 = vrcp.pop 32.0
  %v593 = vmul.f32 %v591, %v592
  %v594 = vsub.f32 %v579, %v593
  %v595 = vsub.f32 %v580, %v593
  %v596 = vsub.f32 %v581, %v593
  %v597 = vsub.f32 %v582, %v593
  %v598 = vmul.f32 %v594, %v594
  %v599 = vmul.f32 %v595, %v595
  %v600 = vmul.f32 %v596, %v596
  %v601 = vmul.f32 %v597, %v597
  %v602 = vadd.f32 %v598, %v599
  %v603 = vadd.f32 %v602, %v600
  %v604 = vadd.f32 %v603, %v601
  %v605 = vrot.slane %v604, 4
  %v606 = vadd.f32 %v604, %v605
  %v607 = vrot.slane %v606, 2
  %v608 = vadd.f32 %v606, %v607
  %v609 = vrot.slane %v608, 1
  %v610 = vadd.f32 %v608, %v609
  %v611 = vmul.f32 %v610, %v592
  %v612 = vadd.f32 %v611, 1e-05
  %v613 = vrsqrt.pop %v612
  %v614 = vmul.f32 %v594, %v613
  %v615 = vmul.f32 %v595, %v613
  %v616 = vmul.f32 %v596, %v613
  %v617 = vmul.f32 %v597, %v613
  %v618 = vld [vmem:[%s4 + $0x60] sm:$0xff]
  %v619 = vld [vmem:[%s4 + $0x68] sm:$0xff]
  %v620 = vld [vmem:[%s4 + $0x70] sm:$0xff]
  %v621 = vld [vmem:[%s4 + $0x78] sm:$0xff]
  %v622 = vld [vmem:[%s5 + $0x60] sm:$0xff]
  %v623 = vld [vmem:[%s5 + $0x68] sm:$0xff]
  %v624 = vld [vmem:[%s5 + $0x70] sm:$0xff]
  %v625 = vld [vmem:[%s5 + $0x78] sm:$0xff]
  %627 = vset.pattern.permute.xlu0 0
  %628 = vperm.xlu0 %627, %v622
  %v629 = vpop.permute.xlu0 %628
  %632 = vset.pattern.permute.xlu0 0
  %633 = vperm.xlu0 %632, %v623
  %v634 = vpop.permute.xlu0 %633
  %637 = vset.pattern.permute.xlu0 0
  %638 = vperm.xlu0 %637, %v624
  %v639 = vpop.permute.xlu0 %638
  %642 = vset.pattern.permute.xlu0 0
  %643 = vperm.xlu0 %642, %v625
  %v644 = vpop.permute.xlu0 %643
  %v647 = vsel %vm83, %v618, 0
  %v650 = vsel %vm83, %v619, 0
  %v653 = vsel %vm83, %v620, 0
  %v656 = vsel %vm83, %v621, 0
  %658 = vmatprep.subr.mxu0 0.0
  %659 = vmatpush1.msra.mxu0 %v614
  %660 = vmatprep.subr.mxu0 0.0
  %661 = vmatpush1.msra.mxu0 %v615
  %662 = vmatprep.subr.mxu0 0.0
  %663 = vmatpush1.msra.mxu0 %v616
  %664 = vmatprep.subr.mxu0 0.0
  %665 = vmatpush1.msra.mxu0 %v617
  %666 = vmatprep.subr.mxu0 0.0
  %667 = vmatpush1.msra.mxu0 0.0
  %668 = vmatprep.subr.mxu0 0.0
  %669 = vmatpush1.msra.mxu0 0.0
  %670 = vmatprep.subr.mxu0 0.0
  %671 = vmatpush1.msra.mxu0 0.0
  %672 = vmatprep.subr.mxu0 0.0
  %673 = vmatpush1.msra.mxu0 0.0
  %674 = vmatprep.subr.mxu0 0.0
  %675 = vmatpush1.msra.mxu0 0.0
  %676 = vmatprep.subr.mxu0 0.0
  %677 = vmatpush1.msra.mxu0 0.0
  %678 = vmatprep.subr.mxu0 0.0
  %679 = vmatpush1.msra.mxu0 0.0
  %680 = vmatprep.subr.mxu0 0.0
  %681 = vmatpush1.msra.mxu0 0.0
  %682 = vmatprep.subr.mxu0 0.0
  %683 = vmatpush1.msra.mxu0 0.0
  %684 = vmatprep.subr.mxu0 0.0
  %685 = vmatpush1.msra.mxu0 0.0
  %686 = vmatprep.subr.mxu0 0.0
  %687 = vmatpush1.msra.mxu0 0.0
  %688 = vmatprep.subr.mxu0 0.0
  %689 = vmatpush1.msra.mxu0 0.0
  %690 = vmatprep.subr.mxu0 0.0
  %691 = vmatpush1.msra.mxu0 0.0
  %692 = vmatprep.subr.mxu0 0.0
  %693 = vmatpush1.msra.mxu0 0.0
  %694 = vmatprep.subr.mxu0 0.0
  %695 = vmatpush1.msra.mxu0 0.0
  %696 = vmatprep.subr.mxu0 0.0
  %697 = vmatpush1.msra.mxu0 0.0
  %698 = vmatprep.subr.mxu0 0.0
  %699 = vmatpush1.msra.mxu0 0.0
  %700 = vmatprep.subr.mxu0 0.0
  %701 = vmatpush1.msra.mxu0 0.0
  %702 = vmatprep.subr.mxu0 0.0
  %703 = vmatpush1.msra.mxu0 0.0
  %704 = vmatprep.subr.mxu0 0.0
  %705 = vmatpush1.msra.mxu0 0.0
  %706 = vmatprep.subr.mxu0 0.0
  %707 = vmatpush1.msra.mxu0 0.0
  %708 = vmatprep.subr.mxu0 0.0
  %709 = vmatpush1.msra.mxu0 0.0
  %710 = vmatprep.subr.mxu0 0.0
  %711 = vmatpush1.msra.mxu0 0.0
  %712 = vmatprep.subr.mxu0 0.0
  %713 = vmatpush1.msra.mxu0 0.0
  %714 = vmatprep.subr.mxu0 0.0
  %715 = vmatpush1.msra.mxu0 0.0
  %716 = vmatprep.subr.mxu0 0.0
  %717 = vmatpush1.msra.mxu0 0.0
  %718 = vmatprep.subr.mxu0 0.0
  %719 = vmatpush1.msra.mxu0 0.0
  %720 = vmatprep.subr.mxu0 0.0
  %721 = vmatpush1.msra.mxu0 0.0
  %722 = vmatprep.mubr.f32.mxu0 0.0
  %723 = vmatmul.mubr.f32.gmra.mrb[0].mxu0 %v647
  %v724 = vpop.f32.mrb[0].mxu0
  %v725 = vadd.f32 %v629, %v724
  %v726 = vpop.f32.mrb[0].mxu0
  %727 = vmatprep.mubr.f32.mxu0 0.0
  %728 = vmatmul.mubr.f32.gmra.mrb[0].mxu0 %v650
  %v729 = vpop.f32.mrb[0].mxu0
  %v730 = vadd.f32 %v634, %v729
  %v731 = vpop.f32.mrb[0].mxu0
  %732 = vmatprep.mubr.f32.mxu0 0.0
  %733 = vmatmul.mubr.f32.gmra.mrb[0].mxu0 %v653
  %v734 = vpop.f32.mrb[0].mxu0
  %v735 = vadd.f32 %v639, %v734
  %v736 = vpop.f32.mrb[0].mxu0
  %737 = vmatprep.mubr.f32.mxu0 0.0
  %738 = vmatmul.mubr.f32.gmra.mrb[0].mxu0 %v656
  %v739 = vpop.f32.mrb[0].mxu0
  %v740 = vadd.f32 %v644, %v739
  %v741 = vpop.f32.mrb[0].mxu0
  %742 = vdwg.mxu0
  %743 = vst [vmem:[%s6] sm:$0xff] %v725
  %744 = vst [vmem:[%s6 + $0x8] sm:$0xff] %v730
  %745 = vst [vmem:[%s6 + $0x10] sm:$0xff] %v735
  %746 = vst [vmem:[%s6 + $0x18] sm:$0xff] %v740
  // Predicated region
  $region26: #{cov_aggregator_forward.1} parent=0 // pred_check
    _
  $region27: #{cov_aggregator_forward.1} parent=0 // pred_check_branch
    %748 = sbr.rel (0) target = $region29
  $region28: #{cov_aggregator_forward.1} parent=0 // pred_region
    _
  $region29: #{cov_aggregator_forward.1} parent=0 // pred_fallthru
    _
  // Predicated region
  $region30: #{cov_aggregator_forward.1} parent=0 // pred_check
    _
  $region31: #{cov_aggregator_forward.1} parent=0 // pred_check_branch
    %750 = sbr.rel (0) target = $region33
  $region32: #{cov_aggregator_forward.1} parent=0 // pred_region
    _
  $region33: #{cov_aggregator_forward.1} parent=0 // pred_fallthru
    _

</llo_original>
